<compile_context>
chip_gen: v6e
topology: v6e:2x2x1
jax: 0.10.0
libtpu: 0.0.40
codegen_flags: <defaults>
</compile_context>

<pallas_src>
import functools
import math

import jax
import jax.numpy as jnp
from jax.experimental import pallas as pl
from jax.experimental.pallas import tpu as pltpu


def _round_up(x: int, m: int) -> int:
    return (x + m - 1) // m * m


def _largest_aligned_divisor(n: int, unit: int, cap: int):
    """Largest d <= cap with d % unit == 0 and n % d == 0, else None."""
    d = (min(cap, n) // unit) * unit
    while d >= unit:
        if n % d == 0:
            return d
        d -= unit
    return None


def _pair_matmuls(x, w0, w1, mode: str):
    """y0 = x @ w0, y1 = x @ w1 with f32 accumulation at the chosen precision."""
    dot = functools.partial(jnp.dot, preferred_element_type=jnp.float32)
    if mode == "fp32":
        hp = jax.lax.Precision.HIGHEST
        return dot(x, w0, precision=hp), dot(x, w1, precision=hp)
    if mode == "bf16":
        xb = x.astype(jnp.bfloat16)
        return dot(xb, w0.astype(jnp.bfloat16)), dot(xb, w1.astype(jnp.bfloat16))
    if mode == "bf16_3x":
        # Manual 3-pass bf16 decomposition (near-fp32 accuracy, single-pass
        # bf16 MXU matmuls). x is split once and reused for both weights.
        x_hi = x.astype(jnp.bfloat16)
        x_lo = (x - x_hi.astype(jnp.float32)).astype(jnp.bfloat16)

        def dot3(w):
            w_hi = w.astype(jnp.bfloat16)
            w_lo = (w - w_hi.astype(jnp.float32)).astype(jnp.bfloat16)
            return dot(x_hi, w_hi) + dot(x_hi, w_lo) + dot(x_lo, w_hi)

        return dot3(w0), dot3(w1)
    raise ValueError(f"unknown precision mode: {mode}")


def _fpl_kernel_single(x_ref, w_ref, o_ref, *, op: str, mode: str):
    # Whole contraction in one step: no accumulators, no init/finalize.
    # x_ref: (tm, K), w_ref: (2, K, tn), o_ref: (tm, tn) f32.
    y0, y1 = _pair_matmuls(x_ref[...], w_ref[0], w_ref[1], mode)
    o_ref[...] = (y0 * y1) if op == "mul" else (y0 + y1)


def _fpl_kernel_ktiled(x_ref, w_ref, o_ref, acc1_ref, *, op: str, mode: str):
    # K tiled: accumulate y0 straight into the f32 output block (it is
    # resident across the K axis) and keep one VMEM scratch for y1.
    # NOTE: correctness of the init/finalize below requires the K axis to be
    # the LAST grid axis and marked "arbitrary".
    k = pl.program_id(2)

    @pl.when(k == 0)
    def _():
        o_ref[...] = jnp.zeros_like(o_ref)
        acc1_ref[...] = jnp.zeros_like(acc1_ref)

    y0, y1 = _pair_matmuls(x_ref[...], w_ref[0], w_ref[1], mode)
    o_ref[...] += y0
    acc1_ref[...] += y1

    @pl.when(k == pl.num_programs(2) - 1)
    def _():
        if op == "mul":
            o_ref[...] = o_ref[...] * acc1_ref[...]
        else:  # "add"
            o_ref[...] = o_ref[...] + acc1_ref[...]


def fused_parallel_linear(x: jax.Array, W: jax.Array, d=None, op: str = "mul",
                          *, tm: int = 512, tn: int = 1024, tk: int = None,
                          precision: str = "bf16_3x") -> jax.Array:
    """x: (..., dim), W: (2, dim, hidden) -> (..., hidden), fp32 output.

    precision: "bf16_3x" (default, ~fp32 accuracy, 3 MXU passes),
               "fp32" (Precision.HIGHEST, 6 passes, exact parity),
               "bf16" (1 pass, fastest).
    tk=None lets the wrapper choose: untiled K when it fits VMEM, otherwise an
    aligned divisor of K.
    """
    if op not in ("mul", "add"):
        raise ValueError(f"unsupported op: {op}")
    if precision not in ("bf16", "bf16_3x", "fp32"):
        raise ValueError(f"unsupported precision mode: {precision}")
    assert W.ndim == 3 and W.shape[0] == 2, "W must be (2, dim, hidden)"
    K, H = int(W.shape[1]), int(W.shape[2])
    assert x.shape[-1] == K

    lead_shape = x.shape[:-1]
    M = math.prod(lead_shape) if lead_shape else 1
    x2d = x.reshape(M, K)

    # ---- per-generation VMEM budget (headroom for Mosaic internal scratch) --
    try:
        info = pltpu.get_tpu_info()
        vmem_cap = int(getattr(info, "vmem_capacity_bytes", 64 << 20))
    except Exception:  # pragma: no cover - conservative fallback
        vmem_cap = 64 << 20
    vmem_budget = max(24 << 20, vmem_cap - (16 << 20))   # ~48 MiB v7x, ~112 MiB v5e/v6e

    # ---- tile selection (respects the fp32 (8,128) tiling constraint) -------
    tm = min(tm, _round_up(M, 8))
    tm = _round_up(max(tm, 8), 8)

    if H <= tn:
        tn = H                                            # full-H block: always legal
    else:
        tn = _largest_aligned_divisor(H, 128, tn) or _round_up(tn, 128)

    def wset_bytes(tm_, tk_, k_tiled_):
        # double-buffered x / W / out fp32 blocks (+ one f32 scratch if K tiled)
        b = 4 * (2 * tm_ * tk_ + 2 * 2 * tk_ * tn + 2 * tm_ * tn)
        return b + (4 * tm_ * tn if k_tiled_ else 0)

    if tk is None:
        # Prefer an untiled contraction (no accumulator round trips) when the
        # working set fits the budget; otherwise tile K with an aligned divisor.
        if wset_bytes(tm, K, False) <= vmem_budget:
            tk = K
        else:
            tk = (_largest_aligned_divisor(K, 128, 1024)
                  or min(_round_up(K, 128), 512))          # fallback: pads K (rare)
    else:
        tk = min(int(tk), K)
        if tk < K:
            tk = _round_up(tk, 128)                        # keep lane alignment

    Kp = _round_up(K, tk)
    Hp = _round_up(H, tn)
    grid_k = Kp // tk
    k_tiled = grid_k > 1

    # Shrink tm if the chosen tiles would overflow the budget.
    while wset_bytes(tm, tk, k_tiled) > vmem_budget and tm > 8:
        tm = max(8, _round_up(tm // 2, 8))
    Mp = _round_up(M, tm)

    # Tiling-constraint sanity checks (catches bad user overrides early).
    assert tm % 8 == 0
    assert tn % 128 == 0 or tn == Hp, f"tn={tn} violates (8,128) tiling for H={H}"
    assert tk % 128 == 0 or tk == Kp, f"tk={tk} violates (8,128) tiling for K={K}"

    # ---- padding (x along M is cheap; W is untouched in the common case) ----
    if (Mp, Kp) != (M, K):
        x2d = jnp.pad(x2d, ((0, Mp - M), (0, Kp - K)))
    Wp = W
    if (Kp, Hp) != (K, H):
        # TODO(synk): pre-pad W once at init to avoid this per-call HBM copy
        # (only reached when H is not a multiple of 128 / K has no aligned divisor).
        Wp = jnp.pad(W, ((0, 0), (0, Kp - K), (0, Hp - H)))

    est_bytes = wset_bytes(tm, tk, k_tiled)
    vmem_limit = int(min(vmem_budget, est_bytes + (8 << 20)))

    cost = pl.CostEstimate(
        flops=2 * 2 * M * K * H,
        transcendentals=0,
        bytes_accessed=4 * (M * K + 2 * K * H + M * H),
    )

    if k_tiled:
        grid = (Mp // tm, Hp // tn, grid_k)
        in_specs = [
            pl.BlockSpec((tm, tk), lambda i, j, k: (i, k)),
            pl.BlockSpec((2, tk, tn), lambda i, j, k: (0, k, j)),
        ]
        out_spec = pl.BlockSpec((tm, tn), lambda i, j, k: (i, j))
        scratch = [pltpu.VMEM((tm, tn), jnp.float32)]       # y1 accumulator only
        kernel = functools.partial(_fpl_kernel_ktiled, op=op, mode=precision)
        dims = ("parallel", "parallel", "arbitrary")         # K axis must stay last
    else:
        grid = (Mp // tm, Hp // tn)
        in_specs = [
            pl.BlockSpec((tm, tk), lambda i, j: (i, 0)),
            pl.BlockSpec((2, tk, tn), lambda i, j: (0, 0, j)),
        ]
        out_spec = pl.BlockSpec((tm, tn), lambda i, j: (i, j))
        scratch = []
        kernel = functools.partial(_fpl_kernel_single, op=op, mode=precision)
        dims = ("parallel", "parallel")

    out2d = pl.pallas_call(
        kernel,
        out_shape=jax.ShapeDtypeStruct((Mp, Hp), jnp.float32),
        grid_spec=pltpu.PrefetchScalarGridSpec(
            num_scalar_prefetch=0,
            grid=grid,
            in_specs=in_specs,
            out_specs=out_spec,
            scratch_shapes=scratch,
        ),
        compiler_params=pltpu.CompilerParams(
            dimension_semantics=dims,
            vmem_limit_bytes=vmem_limit,
        ),
        cost_estimate=cost,
    )(x2d, Wp)

    out2d = out2d[:M, :H]
    return out2d.reshape(*lead_shape, H)


def init_fused_parallel_linear_params(key, dim: int, mlp_ratio: int = 3,
                                      dtype=jnp.float32) -> jax.Array:
    """trunc_normal_(std=0.02, a=-2*std, b=2*std) equivalent."""
    W = jax.random.truncated_normal(
        key, -2.0, 2.0, shape=(2, dim, mlp_ratio * dim), dtype=jnp.float32
    ) * 0.02
    return W.astype(dtype)


if __name__ == "__main__":
    key = jax.random.PRNGKey(0)
    k_w, k_x, k_w2, k_x2 = jax.random.split(key, 4)
    hi = jax.lax.Precision.HIGHEST

    # Small shapes (exercises the untiled-K fast path): B=2, N=8, dim=32.
    B, N, dim, mlp_ratio = 2, 8, 32, 3
    hidden = mlp_ratio * dim
    W = init_fused_parallel_linear_params(k_w, dim, mlp_ratio)
    x = jax.random.normal(k_x, (B, N, dim), dtype=jnp.float32)

    ref0 = jnp.dot(x, W[0], precision=hi)
    ref1 = jnp.dot(x, W[1], precision=hi)

    # op == "mul", default precision ("bf16_3x")
    out_mul = jax.block_until_ready(fused_parallel_linear(x, W, d=None, op="mul"))
    assert out_mul.shape == (B, N, hidden)
    assert jnp.allclose(out_mul, ref0 * ref1, atol=2e-4, rtol=2e-4)

    # op == "add", default precision
    out_add = jax.block_until_ready(fused_parallel_linear(x, W, op="add"))
    assert jnp.allclose(out_add, ref0 + ref1, atol=2e-4, rtol=2e-4)

    # Exact fp32 path (Precision.HIGHEST inside the kernel).
    out_fp32 = jax.block_until_ready(
        fused_parallel_linear(x, W, op="mul", precision="fp32"))
    assert jnp.allclose(out_fp32, ref0 * ref1, atol=1e-5, rtol=1e-5)

    # Force the K-tiled (accumulate-into-o_ref) path with a slightly larger shape.
    dim2, M2 = 256, 64
    W2 = init_fused_parallel_linear_params(k_w2, dim2, 3)
    x2 = jax.random.normal(k_x2, (M2, dim2), dtype=jnp.float32)
    ref2 = jnp.dot(x2, W2[0], precision=hi) * jnp.dot(x2, W2[1], precision=hi)
    out2 = jax.block_until_ready(fused_parallel_linear(x2, W2, op="mul", tk=128))
    assert out2.shape == (M2, 3 * dim2)
    assert jnp.allclose(out2, ref2, atol=2e-4, rtol=2e-4)

    print("KERNEL_OK")
</pallas_src>

<mosaic_0001>
module attributes {stable_mosaic.version = 11 : i64} {
  func.func @_fpl_kernel_single(%arg0: i32, %arg1: i32, %arg2: memref<16x32xf32, #tpu.memory_space<vmem>>, %arg3: memref<2x32x96xf32, #tpu.memory_space<vmem>>, %arg4: memref<16x96xf32, #tpu.memory_space<vmem>>) attributes {dimension_semantics = [#tpu.dimension_semantics<parallel>, #tpu.dimension_semantics<parallel>], iteration_bounds = array<i64: 1, 1>, scalar_prefetch = 0 : i64, scratch_operands = 0 : i64, tpu.core_type = #tpu.core_type<tc>, window_params = [{transform_indices = @transform_0, window_bounds = array<i64: 16, 32>}, {transform_indices = @transform_1, window_bounds = array<i64: 2, 32, 96>}, {transform_indices = @transform_2, window_bounds = array<i64: 16, 96>}]} {
    %c0 = arith.constant 0 : index
    %c0_0 = arith.constant 0 : index
    %0 = vector.load %arg2[%c0, %c0_0] : memref<16x32xf32, #tpu.memory_space<vmem>>, vector<16x32xf32>
    %c0_1 = arith.constant 0 : index
    %c0_2 = arith.constant 0 : index
    %c0_3 = arith.constant 0 : index
    %1 = vector.load %arg3[%c0_1, %c0_2, %c0_3] : memref<2x32x96xf32, #tpu.memory_space<vmem>>, vector<1x32x96xf32>
    %2 = vector.shape_cast %1 : vector<1x32x96xf32> to vector<32x96xf32>
    %c1 = arith.constant 1 : index
    %c0_4 = arith.constant 0 : index
    %c0_5 = arith.constant 0 : index
    %3 = vector.load %arg3[%c1, %c0_4, %c0_5] : memref<2x32x96xf32, #tpu.memory_space<vmem>>, vector<1x32x96xf32>
    %4 = vector.shape_cast %3 : vector<1x32x96xf32> to vector<32x96xf32>
    %5 = arith.truncf %0 : vector<16x32xf32> to vector<16x32xbf16>
    %6 = arith.extf %5 : vector<16x32xbf16> to vector<16x32xf32>
    %7 = arith.subf %0, %6 : vector<16x32xf32>
    %8 = arith.truncf %7 : vector<16x32xf32> to vector<16x32xbf16>
    %9 = arith.truncf %2 : vector<32x96xf32> to vector<32x96xbf16>
    %10 = arith.extf %9 : vector<32x96xbf16> to vector<32x96xf32>
    %11 = arith.subf %2, %10 : vector<32x96xf32>
    %12 = arith.truncf %11 : vector<32x96xf32> to vector<32x96xbf16>
    %cst = arith.constant dense<0.000000e+00> : vector<16x96xf32>
    %13 = tpu.matmul %5, %9, %cst {dimension_numbers = #tpu.dot_dimension_numbers<[1], [0], [0], [1], [0, 0, 1, 1], [], []>} : vector<16x32xbf16>, vector<32x96xbf16>, vector<16x96xf32> -> vector<16x96xf32>
    %cst_6 = arith.constant dense<0.000000e+00> : vector<16x96xf32>
    %14 = tpu.matmul %5, %12, %cst_6 {dimension_numbers = #tpu.dot_dimension_numbers<[1], [0], [0], [1], [0, 0, 1, 1], [], []>} : vector<16x32xbf16>, vector<32x96xbf16>, vector<16x96xf32> -> vector<16x96xf32>
    %15 = arith.addf %13, %14 : vector<16x96xf32>
    %cst_7 = arith.constant dense<0.000000e+00> : vector<16x96xf32>
    %16 = tpu.matmul %8, %9, %cst_7 {dimension_numbers = #tpu.dot_dimension_numbers<[1], [0], [0], [1], [0, 0, 1, 1], [], []>} : vector<16x32xbf16>, vector<32x96xbf16>, vector<16x96xf32> -> vector<16x96xf32>
    %17 = arith.addf %15, %16 : vector<16x96xf32>
    %18 = arith.truncf %4 : vector<32x96xf32> to vector<32x96xbf16>
    %19 = arith.extf %18 : vector<32x96xbf16> to vector<32x96xf32>
    %20 = arith.subf %4, %19 : vector<32x96xf32>
    %21 = arith.truncf %20 : vector<32x96xf32> to vector<32x96xbf16>
    %cst_8 = arith.constant dense<0.000000e+00> : vector<16x96xf32>
    %22 = tpu.matmul %5, %18, %cst_8 {dimension_numbers = #tpu.dot_dimension_numbers<[1], [0], [0], [1], [0, 0, 1, 1], [], []>} : vector<16x32xbf16>, vector<32x96xbf16>, vector<16x96xf32> -> vector<16x96xf32>
    %cst_9 = arith.constant dense<0.000000e+00> : vector<16x96xf32>
    %23 = tpu.matmul %5, %21, %cst_9 {dimension_numbers = #tpu.dot_dimension_numbers<[1], [0], [0], [1], [0, 0, 1, 1], [], []>} : vector<16x32xbf16>, vector<32x96xbf16>, vector<16x96xf32> -> vector<16x96xf32>
    %24 = arith.addf %22, %23 : vector<16x96xf32>
    %cst_10 = arith.constant dense<0.000000e+00> : vector<16x96xf32>
    %25 = tpu.matmul %8, %18, %cst_10 {dimension_numbers = #tpu.dot_dimension_numbers<[1], [0], [0], [1], [0, 0, 1, 1], [], []>} : vector<16x32xbf16>, vector<32x96xbf16>, vector<16x96xf32> -> vector<16x96xf32>
    %26 = arith.addf %24, %25 : vector<16x96xf32>
    %27 = arith.mulf %17, %26 : vector<16x96xf32>
    %c0_11 = arith.constant 0 : index
    %c0_12 = arith.constant 0 : index
    %28 = vector.load %arg4[%c0_11, %c0_12] : memref<16x96xf32, #tpu.memory_space<vmem>>, vector<16x96xf32>
    tpu.vector_store %arg4[%c0_11, %c0_12], %27 {strides = array<i32>} : memref<16x96xf32, #tpu.memory_space<vmem>>, vector<16x96xf32>,
    return
  }
  func.func @transform_0(%arg0: i32, %arg1: i32) -> (i32, i32) {
    %c0_i32 = arith.constant 0 : i32
    %c0_i32_0 = arith.constant 0 : i32
    return %arg0, %c0_i32 : i32, i32
  }
  func.func @transform_1(%arg0: i32, %arg1: i32) -> (i32, i32, i32) {
    %c0_i32 = arith.constant 0 : i32
    %c0_i32_0 = arith.constant 0 : i32
    %c0_i32_1 = arith.constant 0 : i32
    return %c0_i32, %c0_i32_0, %arg1 : i32, i32, i32
  }
  func.func @transform_2(%arg0: i32, %arg1: i32) -> (i32, i32) {
    %c0_i32 = arith.constant 0 : i32
    return %arg0, %arg1 : i32, i32
  }
}

</mosaic_0001>

<llo_original>
// kernel: tpu_custom_call.1
$region0: #{tpu_custom_call.1}
  #allocation0 [shape = 'u32[]', space=smem, size = 0x4, offset = 0x4, fixed_abs, tag = 'smem constant byte address 0x4 - core index']
  #allocation1 [shape = 'u32[144,128]{1,0:T(1,128)}', space=vmem, size = 0x12000, scoped, tag = 'internal scratch']
  %s0 = inlined_call_operand.hbm [shape: f32[16,32], index: 0, kind: input, shape index: {}]
  %s1 = inlined_call_operand.hbm [shape: f32[2,32,96], index: 1, kind: input, shape index: {}]
  %s2 = inlined_call_operand.hbm [shape: f32[16,96], index: 2, kind: output, shape index: {}]
  %s3 = sld [smem:[#allocation0]]
  $region26: #{tpu_custom_call.1} parent=0
    _
  %s5 = ssub.s32 1, %s3
  %s6 = scalar_select 0, %s5, %s3
  $region1: #{tpu_custom_call.1} parent=0
    #allocation2 [shape = 'u8[8192]{0}', space=vmem, size = 0x2000, scoped, tag = 'input window, operand 0, single buffered']
    #allocation3 [shape = 's32[1]{0}', space=sflag, size = 0x4, scoped, tag = 'scoped memory for tpu_custom_call.1']
    #allocation4 [shape = 's32[1]{0}', space=sflag, size = 0x4, scoped, tag = 'scoped memory for tpu_custom_call.1']
    #allocation5 [shape = 'u8[32768]{0}', space=vmem, size = 0x8000, scoped, tag = 'input window, operand 1, single buffered']
    #allocation6 [shape = 's32[1]{0}', space=sflag, size = 0x4, scoped, tag = 'scoped memory for tpu_custom_call.1']
    #allocation7 [shape = 'u8[8192]{0}', space=vmem, size = 0x2000, scoped, tag = 'output window, operand 0, single buffered']
    %7 = vsyncpa [#allocation3], 0
    %8 = vsyncpa [#allocation6], 0
    %9 = vsyncpa [#allocation4], 0
    // Predicated region
    $region2: #{tpu_custom_call.1} parent=1 // pred_check
      _
    $region3: #{tpu_custom_call.1} parent=1 // pred_check_branch
      %11 = sbr.rel (0) target = $region5
    $region4: #{tpu_custom_call.1} parent=1 // pred_region
      %s13 = ssub.s32 256, 256
      %14 = vsyncadd [#allocation3], %s13
      %s15 = sshll.u32 [#allocation2], 4
      %s16 = int_to_ptr.vmem [resolvable:$true] %s15
      %21 = dma.hbm_to_vmem [thread:$0]  %s0, 256, %s16, [#allocation3], 128, 128, 8
    $region5: #{tpu_custom_call.1} parent=1 // pred_fallthru
      _
    // Predicated region
    $region6: #{tpu_custom_call.1} parent=1 // pred_check
      _
    $region7: #{tpu_custom_call.1} parent=1 // pred_check_branch
      %23 = sbr.rel (0) target = $region9
    $region8: #{tpu_custom_call.1} parent=1 // pred_region
      %s25 = ssub.s32 1024, 1024
      %26 = vsyncadd [#allocation6], %s25
      %s27 = sshll.u32 [#allocation5], 4
      %s28 = int_to_ptr.vmem [resolvable:$true] %s27
      %33 = dma.hbm_to_vmem [thread:$0]  %s1, 1024, %s28, [#allocation6], 128, 128, 8
    $region9: #{tpu_custom_call.1} parent=1 // pred_fallthru
      _
    // Predicated region
    $region10: #{tpu_custom_call.1} parent=1 // pred_check
      _
    $region11: #{tpu_custom_call.1} parent=1 // pred_check_branch
      %35 = sbr.rel (0) target = $region13
    $region12: #{tpu_custom_call.1} parent=1 // pred_region
      %36 = dma.done [#allocation3], 256
    $region13: #{tpu_custom_call.1} parent=1 // pred_fallthru
      _
    // Predicated region
    $region14: #{tpu_custom_call.1} parent=1 // pred_check
      _
    $region15: #{tpu_custom_call.1} parent=1 // pred_check_branch
      %38 = sbr.rel (0) target = $region17
    $region16: #{tpu_custom_call.1} parent=1 // pred_region
      %39 = dma.done [#allocation6], 1024
    $region17: #{tpu_custom_call.1} parent=1 // pred_fallthru
      _
    %v41 = vld [vmem:[#allocation2] sm:$0xff]
    %v42 = vld [vmem:[#allocation2 + $0x8] sm:$0xff]
    %v43 = vld [vmem:[#allocation5] sm:$0xff]
    %v44 = vld [vmem:[#allocation5 + $0x8] sm:$0xff]
    %v45 = vld [vmem:[#allocation5 + $0x10] sm:$0xff]
    %v46 = vld [vmem:[#allocation5 + $0x18] sm:$0xff]
    %s47 = scalar_lea.vmem [#allocation5], 32
    %v48 = vld [vmem:[%s47] sm:$0xff]
    %v49 = vld [vmem:[%s47 + $0x8] sm:$0xff]
    %v50 = vld [vmem:[%s47 + $0x10] sm:$0xff]
    %v51 = vld [vmem:[%s47 + $0x18] sm:$0xff]
    %v52 = vpack.c.bf16 %v42, %v41
    %v53 = vunpack.c.l.bf16 %v52
    %v54 = vunpack.c.h.bf16 %v52
    %v55 = vsub.f32 %v41, %v53
    %v56 = vsub.f32 %v42, %v54
    %v57 = vpack.c.bf16 %v56, %v55
    %v58 = vpack.c.bf16 %v44, %v43
    %v59 = vpack.c.bf16 %v46, %v45
    %v60 = vunpack.c.l.bf16 %v58
    %v61 = vunpack.c.h.bf16 %v58
    %v62 = vunpack.c.l.bf16 %v59
    %v63 = vunpack.c.h.bf16 %v59
    %v64 = vsub.f32 %v43, %v60
    %v65 = vsub.f32 %v44, %v61
    %v66 = vsub.f32 %v45, %v62
    %v67 = vsub.f32 %v46, %v63
    %v68 = vpack.c.bf16 %v65, %v64
    %v69 = vpack.c.bf16 %v67, %v66
    %vm70 = vcmask 261120
    %v72 = vsel %vm70, %v52, 0
    %74 = vmatprep.subr.bf16.mxu0 0
    %75 = vmatpush1.bf16.msra.mxu0 0
    %76 = vmatprep.subr.bf16.mxu0 0
    %77 = vmatpush1.bf16.msra.mxu0 0
    %78 = vmatprep.subr.bf16.mxu0 0
    %79 = vmatpush1.bf16.msra.mxu0 0
    %80 = vmatprep.subr.bf16.mxu0 0
    %81 = vmatpush1.bf16.msra.mxu0 0
    %82 = vmatprep.subr.bf16.mxu0 0
    %83 = vmatpush1.bf16.msra.mxu0 0
    %84 = vmatprep.subr.bf16.mxu0 0
    %85 = vmatpush1.bf16.msra.mxu0 0
    %86 = vmatprep.subr.bf16.mxu0 0
    %87 = vmatpush1.bf16.msra.mxu0 %v69
    %88 = vmatprep.subr.bf16.mxu0 0
    %89 = vmatpush1.bf16.msra.mxu0 %v68
    %90 = vmatprep.subr.bf16.mxu0 0
    %91 = vmatpush2.bf16.msra.mxu0 0
    %92 = vmatprep.subr.bf16.mxu0 0
    %93 = vmatpush2.bf16.msra.mxu0 0
    %94 = vmatprep.subr.bf16.mxu0 0
    %95 = vmatpush2.bf16.msra.mxu0 0
    %96 = vmatprep.subr.bf16.mxu0 0
    %97 = vmatpush2.bf16.msra.mxu0 0
    %98 = vmatprep.subr.bf16.mxu0 0
    %99 = vmatpush2.bf16.msra.mxu0 0
    %100 = vmatprep.subr.bf16.mxu0 0
    %101 = vmatpush2.bf16.msra.mxu0 0
    %102 = vmatprep.subr.bf16.mxu0 0
    %103 = vmatpush2.bf16.msra.mxu0 0
    %104 = vmatprep.subr.bf16.mxu0 0
    %105 = vmatpush2.bf16.msra.mxu0 0
    %106 = vmatprep.mubr.bf16.mxu0 0
    %107 = vmatmul.mubr.bf16.gmra.mxu0 %v72
    %v108 = vpop.f32.mrf.mxu0
    %v109 = vadd.f32 0.0, %v108
    %v110 = vpop.f32.mrf.mxu0
    %v111 = vpop.f32.mrf.mxu0
    %v112 = vadd.f32 0.0, %v111
    %v113 = vpop.f32.mrf.mxu0
    %114 = vdwg.mxu0
    %115 = vmatprep.subr.bf16.mxu0 0
    %116 = vmatpush1.bf16.msra.mxu0 0
    %117 = vmatprep.subr.bf16.mxu0 0
    %118 = vmatpush1.bf16.msra.mxu0 0
    %119 = vmatprep.subr.bf16.mxu0 0
    %120 = vmatpush1.bf16.msra.mxu0 0
    %121 = vmatprep.subr.bf16.mxu0 0
    %122 = vmatpush1.bf16.msra.mxu0 0
    %123 = vmatprep.subr.bf16.mxu0 0
    %124 = vmatpush1.bf16.msra.mxu0 0
    %125 = vmatprep.subr.bf16.mxu0 0
    %126 = vmatpush1.bf16.msra.mxu0 0
    %127 = vmatprep.subr.bf16.mxu0 0
    %128 = vmatpush1.bf16.msra.mxu0 %v59
    %129 = vmatprep.subr.bf16.mxu0 0
    %130 = vmatpush1.bf16.msra.mxu0 %v58
    %131 = vmatprep.subr.bf16.mxu0 0
    %132 = vmatpush2.bf16.msra.mxu0 0
    %133 = vmatprep.subr.bf16.mxu0 0
    %134 = vmatpush2.bf16.msra.mxu0 0
    %135 = vmatprep.subr.bf16.mxu0 0
    %136 = vmatpush2.bf16.msra.mxu0 0
    %137 = vmatprep.subr.bf16.mxu0 0
    %138 = vmatpush2.bf16.msra.mxu0 0
    %139 = vmatprep.subr.bf16.mxu0 0
    %140 = vmatpush2.bf16.msra.mxu0 0
    %141 = vmatprep.subr.bf16.mxu0 0
    %142 = vmatpush2.bf16.msra.mxu0 0
    %143 = vmatprep.subr.bf16.mxu0 0
    %144 = vmatpush2.bf16.msra.mxu0 0
    %145 = vmatprep.subr.bf16.mxu0 0
    %146 = vmatpush2.bf16.msra.mxu0 0
    %147 = vmatprep.mubr.bf16.mxu0 0
    %148 = vmatmul.mubr.bf16.gmra.mxu0 %v72
    %v149 = vpop.f32.mrf.mxu0
    %v150 = vadd.f32 %v109, %v149
    %v151 = vpop.f32.mrf.mxu0
    %v152 = vpop.f32.mrf.mxu0
    %v153 = vadd.f32 %v112, %v152
    %v154 = vpop.f32.mrf.mxu0
    %155 = vdwg.mxu0
    %v157 = vsel %vm70, %v57, 0
    %159 = vmatprep.subr.bf16.mxu0 0
    %160 = vmatpush1.bf16.msra.mxu0 0
    %161 = vmatprep.subr.bf16.mxu0 0
    %162 = vmatpush1.bf16.msra.mxu0 0
    %163 = vmatprep.subr.bf16.mxu0 0
    %164 = vmatpush1.bf16.msra.mxu0 0
    %165 = vmatprep.subr.bf16.mxu0 0
    %166 = vmatpush1.bf16.msra.mxu0 0
    %167 = vmatprep.subr.bf16.mxu0 0
    %168 = vmatpush1.bf16.msra.mxu0 0
    %169 = vmatprep.subr.bf16.mxu0 0
    %170 = vmatpush1.bf16.msra.mxu0 0
    %171 = vmatprep.subr.bf16.mxu0 0
    %172 = vmatpush1.bf16.msra.mxu0 %v59
    %173 = vmatprep.subr.bf16.mxu0 0
    %174 = vmatpush1.bf16.msra.mxu0 %v58
    %175 = vmatprep.subr.bf16.mxu0 0
    %176 = vmatpush2.bf16.msra.mxu0 0
    %177 = vmatprep.subr.bf16.mxu0 0
    %178 = vmatpush2.bf16.msra.mxu0 0
    %179 = vmatprep.subr.bf16.mxu0 0
    %180 = vmatpush2.bf16.msra.mxu0 0
    %181 = vmatprep.subr.bf16.mxu0 0
    %182 = vmatpush2.bf16.msra.mxu0 0
    %183 = vmatprep.subr.bf16.mxu0 0
    %184 = vmatpush2.bf16.msra.mxu0 0
    %185 = vmatprep.subr.bf16.mxu0 0
    %186 = vmatpush2.bf16.msra.mxu0 0
    %187 = vmatprep.subr.bf16.mxu0 0
    %188 = vmatpush2.bf16.msra.mxu0 0
    %189 = vmatprep.subr.bf16.mxu0 0
    %190 = vmatpush2.bf16.msra.mxu0 0
    %191 = vmatprep.mubr.bf16.mxu0 0
    %192 = vmatmul.mubr.bf16.gmra.mxu0 %v157
    %v193 = vpop.f32.mrf.mxu0
    %v194 = vadd.f32 0.0, %v193
    %v195 = vpop.f32.mrf.mxu0
    %v196 = vpop.f32.mrf.mxu0
    %v197 = vadd.f32 0.0, %v196
    %v198 = vpop.f32.mrf.mxu0
    %199 = vdwg.mxu0
    %v200 = vadd.f32 %v150, %v194
    %v201 = vadd.f32 %v153, %v197
    %v202 = vpack.c.bf16 %v49, %v48
    %v203 = vpack.c.bf16 %v51, %v50
    %v204 = vunpack.c.l.bf16 %v202
    %v205 = vunpack.c.h.bf16 %v202
    %v206 = vunpack.c.l.bf16 %v203
    %v207 = vunpack.c.h.bf16 %v203
    %v208 = vsub.f32 %v48, %v204
    %v209 = vsub.f32 %v49, %v205
    %v210 = vsub.f32 %v50, %v206
    %v211 = vsub.f32 %v51, %v207
    %v212 = vpack.c.bf16 %v209, %v208
    %v213 = vpack.c.bf16 %v211, %v210
    %214 = vmatprep.subr.bf16.mxu0 0
    %215 = vmatpush1.bf16.msra.mxu0 0
    %216 = vmatprep.subr.bf16.mxu0 0
    %217 = vmatpush1.bf16.msra.mxu0 0
    %218 = vmatprep.subr.bf16.mxu0 0
    %219 = vmatpush1.bf16.msra.mxu0 0
    %220 = vmatprep.subr.bf16.mxu0 0
    %221 = vmatpush1.bf16.msra.mxu0 0
    %222 = vmatprep.subr.bf16.mxu0 0
    %223 = vmatpush1.bf16.msra.mxu0 0
    %224 = vmatprep.subr.bf16.mxu0 0
    %225 = vmatpush1.bf16.msra.mxu0 0
    %226 = vmatprep.subr.bf16.mxu0 0
    %227 = vmatpush1.bf16.msra.mxu0 %v213
    %228 = vmatprep.subr.bf16.mxu0 0
    %229 = vmatpush1.bf16.msra.mxu0 %v212
    %230 = vmatprep.subr.bf16.mxu0 0
    %231 = vmatpush2.bf16.msra.mxu0 0
    %232 = vmatprep.subr.bf16.mxu0 0
    %233 = vmatpush2.bf16.msra.mxu0 0
    %234 = vmatprep.subr.bf16.mxu0 0
    %235 = vmatpush2.bf16.msra.mxu0 0
    %236 = vmatprep.subr.bf16.mxu0 0
    %237 = vmatpush2.bf16.msra.mxu0 0
    %238 = vmatprep.subr.bf16.mxu0 0
    %239 = vmatpush2.bf16.msra.mxu0 0
    %240 = vmatprep.subr.bf16.mxu0 0
    %241 = vmatpush2.bf16.msra.mxu0 0
    %242 = vmatprep.subr.bf16.mxu0 0
    %243 = vmatpush2.bf16.msra.mxu0 0
    %244 = vmatprep.subr.bf16.mxu0 0
    %245 = vmatpush2.bf16.msra.mxu0 0
    %246 = vmatprep.mubr.bf16.mxu0 0
    %247 = vmatmul.mubr.bf16.gmra.mxu0 %v72
    %v248 = vpop.f32.mrf.mxu0
    %v249 = vadd.f32 0.0, %v248
    %v250 = vpop.f32.mrf.mxu0
    %v251 = vpop.f32.mrf.mxu0
    %v252 = vadd.f32 0.0, %v251
    %v253 = vpop.f32.mrf.mxu0
    %254 = vdwg.mxu0
    %255 = vmatprep.subr.bf16.mxu0 0
    %256 = vmatpush1.bf16.msra.mxu0 0
    %257 = vmatprep.subr.bf16.mxu0 0
    %258 = vmatpush1.bf16.msra.mxu0 0
    %259 = vmatprep.subr.bf16.mxu0 0
    %260 = vmatpush1.bf16.msra.mxu0 0
    %261 = vmatprep.subr.bf16.mxu0 0
    %262 = vmatpush1.bf16.msra.mxu0 0
    %263 = vmatprep.subr.bf16.mxu0 0
    %264 = vmatpush1.bf16.msra.mxu0 0
    %265 = vmatprep.subr.bf16.mxu0 0
    %266 = vmatpush1.bf16.msra.mxu0 0
    %267 = vmatprep.subr.bf16.mxu0 0
    %268 = vmatpush1.bf16.msra.mxu0 %v203
    %269 = vmatprep.subr.bf16.mxu0 0
    %270 = vmatpush1.bf16.msra.mxu0 %v202
    %271 = vmatprep.subr.bf16.mxu0 0
    %272 = vmatpush2.bf16.msra.mxu0 0
    %273 = vmatprep.subr.bf16.mxu0 0
    %274 = vmatpush2.bf16.msra.mxu0 0
    %275 = vmatprep.subr.bf16.mxu0 0
    %276 = vmatpush2.bf16.msra.mxu0 0
    %277 = vmatprep.subr.bf16.mxu0 0
    %278 = vmatpush2.bf16.msra.mxu0 0
    %279 = vmatprep.subr.bf16.mxu0 0
    %280 = vmatpush2.bf16.msra.mxu0 0
    %281 = vmatprep.subr.bf16.mxu0 0
    %282 = vmatpush2.bf16.msra.mxu0 0
    %283 = vmatprep.subr.bf16.mxu0 0
    %284 = vmatpush2.bf16.msra.mxu0 0
    %285 = vmatprep.subr.bf16.mxu0 0
    %286 = vmatpush2.bf16.msra.mxu0 0
    %287 = vmatprep.mubr.bf16.mxu0 0
    %288 = vmatmul.mubr.bf16.gmra.mxu0 %v72
    %v289 = vpop.f32.mrf.mxu0
    %v290 = vadd.f32 %v249, %v289
    %v291 = vpop.f32.mrf.mxu0
    %v292 = vpop.f32.mrf.mxu0
    %v293 = vadd.f32 %v252, %v292
    %v294 = vpop.f32.mrf.mxu0
    %295 = vdwg.mxu0
    %296 = vmatprep.subr.bf16.mxu0 0
    %297 = vmatpush1.bf16.msra.mxu0 0
    %298 = vmatprep.subr.bf16.mxu0 0
    %299 = vmatpush1.bf16.msra.mxu0 0
    %300 = vmatprep.subr.bf16.mxu0 0
    %301 = vmatpush1.bf16.msra.mxu0 0
    %302 = vmatprep.subr.bf16.mxu0 0
    %303 = vmatpush1.bf16.msra.mxu0 0
    %304 = vmatprep.subr.bf16.mxu0 0
    %305 = vmatpush1.bf16.msra.mxu0 0
    %306 = vmatprep.subr.bf16.mxu0 0
    %307 = vmatpush1.bf16.msra.mxu0 0
    %308 = vmatprep.subr.bf16.mxu0 0
    %309 = vmatpush1.bf16.msra.mxu0 %v203
    %310 = vmatprep.subr.bf16.mxu0 0
    %311 = vmatpush1.bf16.msra.mxu0 %v202
    %312 = vmatprep.subr.bf16.mxu0 0
    %313 = vmatpush2.bf16.msra.mxu0 0
    %314 = vmatprep.subr.bf16.mxu0 0
    %315 = vmatpush2.bf16.msra.mxu0 0
    %316 = vmatprep.subr.bf16.mxu0 0
    %317 = vmatpush2.bf16.msra.mxu0 0
    %318 = vmatprep.subr.bf16.mxu0 0
    %319 = vmatpush2.bf16.msra.mxu0 0
    %320 = vmatprep.subr.bf16.mxu0 0
    %321 = vmatpush2.bf16.msra.mxu0 0
    %322 = vmatprep.subr.bf16.mxu0 0
    %323 = vmatpush2.bf16.msra.mxu0 0
    %324 = vmatprep.subr.bf16.mxu0 0
    %325 = vmatpush2.bf16.msra.mxu0 0
    %326 = vmatprep.subr.bf16.mxu0 0
    %327 = vmatpush2.bf16.msra.mxu0 0
    %328 = vmatprep.mubr.bf16.mxu0 0
    %329 = vmatmul.mubr.bf16.gmra.mxu0 %v157
    %v330 = vpop.f32.mrf.mxu0
    %v331 = vadd.f32 0.0, %v330
    %v332 = vpop.f32.mrf.mxu0
    %v333 = vpop.f32.mrf.mxu0
    %v334 = vadd.f32 0.0, %v333
    %v335 = vpop.f32.mrf.mxu0
    %336 = vdwg.mxu0
    %v337 = vadd.f32 %v290, %v331
    %v338 = vadd.f32 %v293, %v334
    %v339 = vmul.f32 %v200, %v337
    %v340 = vmul.f32 %v201, %v338
    %vm341 = vcmask 785408
    %342 = vst.msk [vmem:[#allocation7] sm:$0xff] %vm341, %v339
    %343 = vst.msk [vmem:[#allocation7 + $0x8] sm:$0xff] %vm341, %v340
    // Predicated region
    $region18: #{tpu_custom_call.1} parent=1 // pred_check
      _
    $region19: #{tpu_custom_call.1} parent=1 // pred_check_branch
      %345 = sbr.rel (0) target = $region21
    $region20: #{tpu_custom_call.1} parent=1 // pred_region
      %s347 = ssub.s32 256, 256
      %348 = vsyncadd [#allocation4], %s347
      %s349 = sshll.u32 [#allocation7], 4
      %s350 = int_to_ptr.vmem [resolvable:$true] %s349
      %355 = dma.vmem_to_hbm [thread:$0]  %s350, 256, %s2, [#allocation4], 128, 128, 8
    $region21: #{tpu_custom_call.1} parent=1 // pred_fallthru
      _
    // Predicated region
    $region22: #{tpu_custom_call.1} parent=1 // pred_check
      _
    $region23: #{tpu_custom_call.1} parent=1 // pred_check_branch
      %357 = sbr.rel (0) target = $region25
    $region24: #{tpu_custom_call.1} parent=1 // pred_region
      %358 = dma.done [#allocation4], 256
    $region25: #{tpu_custom_call.1} parent=1 // pred_fallthru
      _
    %359 = vsyncpa [#allocation3], 1
    %360 = vsyncpa [#allocation6], 1
    %361 = vsyncpa [#allocation4], 1

</llo_original>
